<compile_context>
chip_gen: v6e
topology: v6e:2x2x1
jax: 0.10.0
libtpu: 0.0.40
codegen_flags: <defaults>
</compile_context>

<pallas_src>
import functools

import jax
import jax.numpy as jnp
from jax.experimental import pallas as pl
from jax.experimental.pallas import tpu as pltpu

LINEAR_BIAS_M = 0.4   # `linear_bias_m` in the reference module
LN_EPS = 1e-5         # PyTorch nn.LayerNorm default
VMEM_LIMIT = 64 * 1024 * 1024


def _tile(dim, target, align):
    """Largest tile <= target that is a multiple of `align` and divides dim.
    Falls back to the full dim (always legal as a block)."""
    if dim <= target:
        return dim
    t = (target // align) * align
    while t >= align:
        if dim % t == 0:
            return t
        t -= align
    return dim


# ----------------------------- tiled linear --------------------------------

def _linear_kernel(*refs, activation, has_bias, has_residual, has_ln):
    i = 0
    x_ref = refs[i]; i += 1
    w_ref = refs[i]; i += 1
    b_ref = r_ref = g_ref = beta_ref = None
    if has_bias:
        b_ref = refs[i]; i += 1
    if has_residual:
        r_ref = refs[i]; i += 1
    if has_ln:
        g_ref = refs[i]; i += 1
        beta_ref = refs[i]; i += 1
    o_ref, acc_ref = refs[i], refs[i + 1]

    k = pl.program_id(2)

    @pl.when(k == 0)
    def _():
        acc_ref[...] = jnp.zeros_like(acc_ref)

    # bf16 x bf16 operands on the MXU, f32 accumulation.
    acc_ref[...] += jnp.dot(x_ref[...], w_ref[...],
                            preferred_element_type=jnp.float32)

    @pl.when(k == pl.num_programs(2) - 1)
    def _():
        y = acc_ref[...]
        if has_bias:
            y = y + b_ref[...]
        if activation == "relu":
            y = jnp.maximum(y, 0.0)
        if has_residual:
            y = y + r_ref[...].astype(jnp.float32)
        if has_ln:
            mean = jnp.mean(y, axis=-1, keepdims=True)
            var = jnp.mean(jnp.square(y - mean), axis=-1, keepdims=True)
            y = (y - mean) * jax.lax.rsqrt(var + LN_EPS) * g_ref[...] + beta_ref[...]
        o_ref[...] = y.astype(o_ref.dtype)


def linear(x, w, b=None, residual=None, activation=None, ln=None,
           tm=512, tn=512, tk=512):
    """y = ln(act(x @ w + b) + residual).  x: (M,K) bf16, w: (K,N) bf16."""
    M, K = x.shape
    K2, N = w.shape
    assert K == K2
    tm = _tile(M, tm, 8)
    tk = _tile(K, tk, 128)
    # fused LayerNorm needs a full output row in one tile
    tn = N if ln is not None else _tile(N, tn, 128)
    grid = (M // tm, N // tn, K // tk)

    in_specs = [pl.BlockSpec((tm, tk), lambda i, j, k: (i, k)),
                pl.BlockSpec((tk, tn), lambda i, j, k: (k, j))]
    args = [x, w]
    if b is not None:
        in_specs.append(pl.BlockSpec((1, tn), lambda i, j, k: (0, j)))
        args.append(b.reshape(1, N))
    if residual is not None:
        in_specs.append(pl.BlockSpec((tm, tn), lambda i, j, k: (i, j)))
        args.append(residual)
    if ln is not None:
        g, beta = ln
        in_specs.append(pl.BlockSpec((1, tn), lambda i, j, k: (0, j)))
        in_specs.append(pl.BlockSpec((1, tn), lambda i, j, k: (0, j)))
        args.append(g.reshape(1, N))
        args.append(beta.reshape(1, N))

    return pl.pallas_call(
        functools.partial(_linear_kernel, activation=activation,
                          has_bias=b is not None,
                          has_residual=residual is not None,
                          has_ln=ln is not None),
        out_shape=jax.ShapeDtypeStruct((M, N), jnp.bfloat16),
        grid=grid,
        in_specs=in_specs,
        out_specs=pl.BlockSpec((tm, tn), lambda i, j, k: (i, j)),
        scratch_shapes=[pltpu.VMEM((tm, tn), jnp.float32)],
        compiler_params=pltpu.CompilerParams(
            dimension_semantics=("parallel", "parallel", "arbitrary"),
            vmem_limit_bytes=VMEM_LIMIT),
    )(*args)


# ------------------------------- layernorm ----------------------------------

def _layernorm_kernel(x_ref, g_ref, b_ref, o_ref):
    x = x_ref[...].astype(jnp.float32)
    mean = jnp.mean(x, axis=-1, keepdims=True)
    var = jnp.mean(jnp.square(x - mean), axis=-1, keepdims=True)
    inv = jax.lax.rsqrt(var + LN_EPS)
    o_ref[...] = ((x - mean) * inv * g_ref[...] + b_ref[...]).astype(o_ref.dtype)


def layernorm(x, gamma, beta, tm=512):
    M, C = x.shape
    tm = _tile(M, tm, 8)
    return pl.pallas_call(
        _layernorm_kernel,
        out_shape=jax.ShapeDtypeStruct((M, C), jnp.bfloat16),
        grid=(M // tm,),
        in_specs=[pl.BlockSpec((tm, C), lambda i: (i, 0)),
                  pl.BlockSpec((1, C), lambda i: (0, 0)),
                  pl.BlockSpec((1, C), lambda i: (0, 0))],
        out_specs=pl.BlockSpec((tm, C), lambda i: (i, 0)),
        compiler_params=pltpu.CompilerParams(
            dimension_semantics=("parallel",),
            vmem_limit_bytes=VMEM_LIMIT),
    )(x, gamma.reshape(1, C), beta.reshape(1, C))


# ----------------------- flash attention w/ ALiBi bias ----------------------

def _attn_kernel(q_ref, k_ref, v_ref, o_ref, m_scr, l_scr, acc_scr, *,
                 n_head, head_size, tq, tkv, scale, bias_m):
    qi = pl.program_id(0)
    ki = pl.program_id(2)
    nk = pl.num_programs(2)

    @pl.when(ki == 0)
    def _():
        m_scr[...] = jnp.full_like(m_scr, -jnp.inf)
        l_scr[...] = jnp.zeros_like(l_scr)
        acc_scr[...] = jnp.zeros_like(acc_scr)

    # skip kv tiles that are entirely above the causal diagonal (the clamped
    # index_map also suppresses their DMA)
    @pl.when(ki * tkv <= qi * tq + (tq - 1))
    def _():
        rows = qi * tq + jax.lax.broadcasted_iota(jnp.int32, (tq, tkv), 0)
        cols = ki * tkv + jax.lax.broadcasted_iota(jnp.int32, (tq, tkv), 1)
        causal = cols <= rows
        # ALiBi linear bias on the kept (j <= i) entries, -inf above diagonal
        bias = jnp.where(causal,
                         (cols - rows).astype(jnp.float32) * bias_m,
                         -jnp.inf)

        q = q_ref[0]          # (tq,  n_head*hs) bf16
        k = k_ref[0]          # (tkv, n_head*hs) bf16
        v = v_ref[0]          # (tkv, n_head*hs) bf16

        dn = (((1,), (1,)), ((), ()))   # contract last dims -> q @ k^T, no transpose op
        for h in range(n_head):
            sl = slice(h * head_size, (h + 1) * head_size)
            s = jax.lax.dot_general(q[:, sl], k[:, sl], dn,
                                    preferred_element_type=jnp.float32) + bias
            m_prev = m_scr[h]                                    # (tq, 1)
            m_new = jnp.maximum(m_prev, jnp.max(s, axis=-1, keepdims=True))
            alpha = jnp.exp(m_prev - m_new)
            p = jnp.exp(s - m_new)
            l_scr[h] = alpha * l_scr[h] + jnp.sum(p, axis=-1, keepdims=True)
            acc_scr[:, sl] = alpha * acc_scr[:, sl] + jnp.dot(
                p.astype(jnp.bfloat16), v[:, sl],
                preferred_element_type=jnp.float32)
            m_scr[h] = m_new

    @pl.when(ki == nk - 1)
    def _():
        for h in range(n_head):
            sl = slice(h * head_size, (h + 1) * head_size)
            # reference scales V (not the scores) by head_size**-0.5; scale
            # distributes over the accumulation so it is applied once here.
            inv = pl.reciprocal(l_scr[h], approx=True) * scale
            acc_scr[:, sl] = acc_scr[:, sl] * inv
        o_ref[0] = acc_scr[...].astype(o_ref.dtype)


def attention(q, k, v, n_head, tq=256, tkv=256):
    """q, k, v: (B, T, C) bf16 with C = n_head * head_size. Returns (B, T, C)."""
    B, T, C = q.shape
    hs = C // n_head
    tq = _tile(T, tq, 8)
    tkv = _tile(T, tkv, 8)
    scale = float(hs) ** (-0.5)

    def q_map(i, b, j):
        return (b, i, 0)

    def kv_map(i, b, j):
        # clamp to the causal diagonal: fully-masked kv tiles resolve to the
        # previously fetched block index -> no wasted DMA.
        return (b, jnp.minimum(j, (i * tq + tq - 1) // tkv), 0)

    return pl.pallas_call(
        functools.partial(_attn_kernel, n_head=n_head, head_size=hs,
                          tq=tq, tkv=tkv, scale=scale, bias_m=LINEAR_BIAS_M),
        out_shape=jax.ShapeDtypeStruct((B, T, C), jnp.bfloat16),
        grid=(T // tq, B, T // tkv),
        in_specs=[pl.BlockSpec((1, tq, C), q_map),
                  pl.BlockSpec((1, tkv, C), kv_map),
                  pl.BlockSpec((1, tkv, C), kv_map)],
        out_specs=pl.BlockSpec((1, tq, C), q_map),
        scratch_shapes=[pltpu.VMEM((n_head, tq, 1), jnp.float32),
                        pltpu.VMEM((n_head, tq, 1), jnp.float32),
                        pltpu.VMEM((tq, C), jnp.float32)],
        compiler_params=pltpu.CompilerParams(
            dimension_semantics=("parallel", "parallel", "arbitrary"),
            vmem_limit_bytes=VMEM_LIMIT),
    )(q, k, v)


# ---------------- fused LM head (vocab proj) + cross-entropy ----------------

def _lmhead_ce_kernel(x_ref, w_ref, b_ref, t_ref, o_ref,
                      m_scr, l_scr, p_scr, *, tv):
    vj = pl.program_id(1)
    nv = pl.num_programs(1)

    @pl.when(vj == 0)
    def _():
        m_scr[...] = jnp.full_like(m_scr, -jnp.inf)
        l_scr[...] = jnp.zeros_like(l_scr)
        p_scr[...] = jnp.zeros_like(p_scr)

    logits = jnp.dot(x_ref[...], w_ref[...],
                     preferred_element_type=jnp.float32) + b_ref[...]
    cols = vj * tv + jax.lax.broadcasted_iota(jnp.int32, logits.shape, 1)
    hit = (cols == t_ref[...]).astype(jnp.float32)
    p_scr[...] += jnp.sum(logits * hit, axis=-1, keepdims=True)

    m_prev = m_scr[...]
    m_new = jnp.maximum(m_prev, jnp.max(logits, axis=-1, keepdims=True))
    l_scr[...] = (l_scr[...] * jnp.exp(m_prev - m_new) +
                  jnp.sum(jnp.exp(logits - m_new), axis=-1, keepdims=True))
    m_scr[...] = m_new

    @pl.when(vj == nv - 1)
    def _():
        o_ref[...] = m_scr[...] + jnp.log(l_scr[...]) - p_scr[...]


def lm_head_cross_entropy(x, w, b, targets, tm=512, tv=1024):
    """Per-token NLL of softmax(x @ w + b) at `targets`, streamed over vocab
    tiles so logits never hit HBM.  x: (M, C) bf16, w: (C, V) bf16."""
    M, C = x.shape
    _, V = w.shape
    tm = _tile(M, tm, 8)
    tv = _tile(V, tv, 128)
    return pl.pallas_call(
        functools.partial(_lmhead_ce_kernel, tv=tv),
        out_shape=jax.ShapeDtypeStruct((M, 1), jnp.float32),
        grid=(M // tm, V // tv),
        in_specs=[pl.BlockSpec((tm, C), lambda i, v: (i, 0)),
                  pl.BlockSpec((C, tv), lambda i, v: (0, v)),
                  pl.BlockSpec((1, tv), lambda i, v: (0, v)),
                  pl.BlockSpec((tm, 1), lambda i, v: (i, 0))],
        out_specs=pl.BlockSpec((tm, 1), lambda i, v: (i, 0)),
        scratch_shapes=[pltpu.VMEM((tm, 1), jnp.float32),
                        pltpu.VMEM((tm, 1), jnp.float32),
                        pltpu.VMEM((tm, 1), jnp.float32)],
        compiler_params=pltpu.CompilerParams(
            dimension_semantics=("parallel", "arbitrary"),
            vmem_limit_bytes=VMEM_LIMIT),
    )(x, w, b.reshape(1, V), targets.reshape(M, 1).astype(jnp.int32))


# ----------------------------- model assembly -------------------------------

def init_params(key, vocab_size, n_embd, n_head, n_layer, n_hidden):
    keys = jax.random.split(key, 4 + n_layer)

    def nrm(k, shape, s=0.1, dtype=jnp.bfloat16):
        return (jax.random.normal(k, shape, jnp.float32) * s).astype(dtype)

    params = {
        "emb": nrm(keys[0], (vocab_size, n_embd)),
        "ln_g": jnp.ones((n_embd,), jnp.float32),
        "ln_b": jnp.zeros((n_embd,), jnp.float32),
        "proj_w": nrm(keys[1], (n_embd, vocab_size)),
        "proj_b": nrm(keys[2], (vocab_size,), dtype=jnp.float32),
        "blocks": [],
    }
    for l in range(n_layer):
        bk = jax.random.split(keys[4 + l], 10)
        params["blocks"].append({
            "Wq": nrm(bk[0], (n_embd, n_embd)),    # per-head q/k/v weights concat
            "Wk": nrm(bk[1], (n_embd, n_embd)),
            "Wv": nrm(bk[2], (n_embd, n_embd)),
            "Wp": nrm(bk[3], (n_embd, n_embd)),
            "bp": nrm(bk[4], (n_embd,), dtype=jnp.float32),
            "W1": nrm(bk[5], (n_embd, n_hidden)),
            "b1": nrm(bk[6], (n_hidden,), dtype=jnp.float32),
            "W2": nrm(bk[7], (n_hidden, n_embd)),
            "b2": nrm(bk[8], (n_embd,), dtype=jnp.float32),
            "ln1_g": jnp.ones((n_embd,), jnp.float32),
            "ln1_b": jnp.zeros((n_embd,), jnp.float32),
            "ln2_g": jnp.ones((n_embd,), jnp.float32),
            "ln2_b": jnp.zeros((n_embd,), jnp.float32),
        })
    return params


def block_forward(p, xln, next_ln, n_head, B, T):
    """xln: (B*T, C), already normalized by this block's ln1.
    Returns next_ln(block output) (the raw block output is never needed)."""
    C = xln.shape[1]

    # Q/K/V projections written straight to their own buffers (no bias, as in
    # the module) -- no packed-qkv slice copies in HBM.
    q = linear(xln, p["Wq"]).reshape(B, T, C)
    k = linear(xln, p["Wk"]).reshape(B, T, C)
    v = linear(xln, p["Wv"]).reshape(B, T, C)

    att = attention(q, k, v, n_head).reshape(B * T, C)

    # proj + bias + residual over ln1(x), fused in the linear epilogue
    x1 = linear(att, p["Wp"], p["bp"], residual=xln)

    x1ln = layernorm(x1, p["ln2_g"], p["ln2_b"])
    h = linear(x1ln, p["W1"], p["b1"], activation="relu")
    # MLP out + bias + residual + the NEXT LayerNorm, all in one epilogue
    return linear(h, p["W2"], p["b2"], residual=x1, ln=next_ln)


def alibi_forward(params, x_tokens, y_tokens, n_head):
    B, T = x_tokens.shape
    C = params["emb"].shape[1]
    blocks = params["blocks"]

    h = jnp.take(params["emb"], x_tokens, axis=0).reshape(B * T, C)  # gather (glue)
    # first block's ln1 runs standalone on the embedding output; every later
    # LN in the chain (next ln1 / final ln) is fused into a linear epilogue.
    hln = layernorm(h, blocks[0]["ln1_g"], blocks[0]["ln1_b"])
    for i, p in enumerate(blocks):
        if i + 1 < len(blocks):
            next_ln = (blocks[i + 1]["ln1_g"], blocks[i + 1]["ln1_b"])
        else:
            next_ln = (params["ln_g"], params["ln_b"])
        hln = block_forward(p, hln, next_ln, n_head, B, T)

    losses = lm_head_cross_entropy(hln, params["proj_w"], params["proj_b"],
                                   y_tokens.reshape(-1))
    return jnp.mean(losses)                          # CrossEntropyLoss mean


# --------------------------------- main --------------------------------------

if __name__ == "__main__":
    vocab_size = 32
    n_embd = 32
    n_head = 4
    block_size = 8
    n_layer = 2
    n_hidden = 64
    B = 2

    key = jax.random.PRNGKey(0)
    kp, kx, ky = jax.random.split(key, 3)

    params = init_params(kp, vocab_size, n_embd, n_head, n_layer, n_hidden)
    x = jax.random.randint(kx, (B, block_size), 0, vocab_size, dtype=jnp.int32)
    y = jax.random.randint(ky, (B, block_size), 0, vocab_size, dtype=jnp.int32)

    loss = alibi_forward(params, x, y, n_head)
    loss = jax.block_until_ready(loss)
    assert loss.shape == () and bool(jnp.isfinite(loss))
    print("KERNEL_OK")
</pallas_src>

<mosaic_0001>
module attributes {stable_mosaic.version = 11 : i64} {
  func.func @_layernorm_kernel(%arg0: i32, %arg1: memref<16x32xbf16, #tpu.memory_space<vmem>>, %arg2: memref<1x32xf32, #tpu.memory_space<vmem>>, %arg3: memref<1x32xf32, #tpu.memory_space<vmem>>, %arg4: memref<16x32xbf16, #tpu.memory_space<vmem>>) attributes {dimension_semantics = [#tpu.dimension_semantics<parallel>], iteration_bounds = array<i64: 1>, scalar_prefetch = 0 : i64, scratch_operands = 0 : i64, tpu.core_type = #tpu.core_type<tc>, window_params = [{transform_indices = @transform_0, window_bounds = array<i64: 16, 32>}, {pipeline_mode = #tpu.pipeline_mode<synchronous>, transform_indices = @transform_1, window_bounds = array<i64: 1, 32>}, {pipeline_mode = #tpu.pipeline_mode<synchronous>, transform_indices = @transform_2, window_bounds = array<i64: 1, 32>}, {transform_indices = @transform_3, window_bounds = array<i64: 16, 32>}]} {
    %c0 = arith.constant 0 : index
    %c0_0 = arith.constant 0 : index
    %0 = vector.load %arg1[%c0, %c0_0] : memref<16x32xbf16, #tpu.memory_space<vmem>>, vector<16x32xbf16>
    %1 = arith.extf %0 : vector<16x32xbf16> to vector<16x32xf32>
    %cst = arith.constant dense<0.000000e+00> : vector<16xf32>
    %2 = vector.multi_reduction <add>, %1, %cst [1] : vector<16x32xf32> to vector<16xf32>
    %3 = vector.shape_cast %2 : vector<16xf32> to vector<16x1xf32>
    %cst_1 = arith.constant 3.200000e+01 : f32
    %4 = vector.broadcast %cst_1 : f32 to vector<16x1xf32>
    %5 = arith.divf %3, %4 : vector<16x1xf32>
    %6 = vector.broadcast %5 : vector<16x1xf32> to vector<16x32xf32>
    %7 = arith.subf %1, %6 : vector<16x32xf32>
    %8 = arith.mulf %7, %7 : vector<16x32xf32>
    %cst_2 = arith.constant dense<0.000000e+00> : vector<16xf32>
    %9 = vector.multi_reduction <add>, %8, %cst_2 [1] : vector<16x32xf32> to vector<16xf32>
    %10 = vector.shape_cast %9 : vector<16xf32> to vector<16x1xf32>
    %cst_3 = arith.constant 3.200000e+01 : f32
    %11 = vector.broadcast %cst_3 : f32 to vector<16x1xf32>
    %12 = arith.divf %10, %11 : vector<16x1xf32>
    %cst_4 = arith.constant 9.99999974E-6 : f32
    %13 = vector.broadcast %cst_4 : f32 to vector<16x1xf32>
    %14 = arith.addf %12, %13 : vector<16x1xf32>
    %15 = math.rsqrt %14 : vector<16x1xf32>
    %16 = vector.broadcast %5 : vector<16x1xf32> to vector<16x32xf32>
    %17 = arith.subf %1, %16 : vector<16x32xf32>
    %18 = vector.broadcast %15 : vector<16x1xf32> to vector<16x32xf32>
    %19 = arith.mulf %17, %18 : vector<16x32xf32>
    %c0_5 = arith.constant 0 : index
    %c0_6 = arith.constant 0 : index
    %20 = vector.load %arg2[%c0_5, %c0_6] : memref<1x32xf32, #tpu.memory_space<vmem>>, vector<1x32xf32>
    %21 = vector.broadcast %20 : vector<1x32xf32> to vector<16x32xf32>
    %22 = arith.mulf %19, %21 : vector<16x32xf32>
    %c0_7 = arith.constant 0 : index
    %c0_8 = arith.constant 0 : index
    %23 = vector.load %arg3[%c0_7, %c0_8] : memref<1x32xf32, #tpu.memory_space<vmem>>, vector<1x32xf32>
    %24 = vector.broadcast %23 : vector<1x32xf32> to vector<16x32xf32>
    %25 = arith.addf %22, %24 : vector<16x32xf32>
    %26 = arith.truncf %25 : vector<16x32xf32> to vector<16x32xbf16>
    %c0_9 = arith.constant 0 : index
    %c0_10 = arith.constant 0 : index
    %27 = vector.load %arg4[%c0_9, %c0_10] : memref<16x32xbf16, #tpu.memory_space<vmem>>, vector<16x32xbf16>
    tpu.vector_store %arg4[%c0_9, %c0_10], %26 {strides = array<i32>} : memref<16x32xbf16, #tpu.memory_space<vmem>>, vector<16x32xbf16>,
    return
  }
  func.func @transform_0(%arg0: i32) -> (i32, i32) {
    %c0_i32 = arith.constant 0 : i32
    %c0_i32_0 = arith.constant 0 : i32
    return %arg0, %c0_i32 : i32, i32
  }
  func.func @transform_1(%arg0: i32) -> (i32, i32) {
    %c0_i32 = arith.constant 0 : i32
    %c0_i32_0 = arith.constant 0 : i32
    %c0_i32_1 = arith.constant 0 : i32
    return %c0_i32, %c0_i32_0 : i32, i32
  }
  func.func @transform_2(%arg0: i32) -> (i32, i32) {
    %c0_i32 = arith.constant 0 : i32
    %c0_i32_0 = arith.constant 0 : i32
    %c0_i32_1 = arith.constant 0 : i32
    return %c0_i32, %c0_i32_0 : i32, i32
  }
  func.func @transform_3(%arg0: i32) -> (i32, i32) {
    %c0_i32 = arith.constant 0 : i32
    %c0_i32_0 = arith.constant 0 : i32
    return %arg0, %c0_i32 : i32, i32
  }
}

</mosaic_0001>

<llo_original>
// kernel: tpu_custom_call.1
$region0: #{tpu_custom_call.1}
  #allocation0 [shape = 'u32[]', space=smem, size = 0x4, offset = 0x4, fixed_abs, tag = 'smem constant byte address 0x4 - core index']
  #allocation1 [shape = 'u32[144,128]{1,0:T(1,128)}', space=vmem, size = 0x12000, scoped, tag = 'internal scratch']
  %s0 = inlined_call_operand.hbm [shape: bf16[16,32], index: 0, kind: input, shape index: {}]
  %s1 = inlined_call_operand.vmem [shape: f32[1,32], index: 1, kind: input, shape index: {}]
  %s2 = inlined_call_operand.vmem [shape: f32[1,32], index: 2, kind: input, shape index: {}]
  %s3 = inlined_call_operand.hbm [shape: bf16[16,32], index: 3, kind: output, shape index: {}]
  %s4 = sld [smem:[#allocation0]]
  $region26: #{tpu_custom_call.1} parent=0
    _
  %s6 = ssub.s32 1, %s4
  %s7 = scalar_select 0, %s6, %s4
  $region1: #{tpu_custom_call.1} parent=0
    #allocation2 [shape = 'u8[4096]{0}', space=vmem, size = 0x1000, scoped, tag = 'input window, operand 0, single buffered']
    #allocation3 [shape = 's32[1]{0}', space=sflag, size = 0x4, scoped, tag = 'scoped memory for tpu_custom_call.1']
    #allocation4 [shape = 's32[1]{0}', space=sflag, size = 0x4, scoped, tag = 'scoped memory for tpu_custom_call.1']
    #allocation5 [shape = 'u8[4096]{0}', space=vmem, size = 0x1000, scoped, tag = 'output window, operand 0, single buffered']
    %8 = vsyncpa [#allocation3], 0
    %9 = vsyncpa [#allocation4], 0
    // Predicated region
    $region2: #{tpu_custom_call.1} parent=1 // pred_check
      _
    $region3: #{tpu_custom_call.1} parent=1 // pred_check_branch
      %11 = sbr.rel (0) target = $region5
    $region4: #{tpu_custom_call.1} parent=1 // pred_region
      %s13 = ssub.s32 128, 128
      %14 = vsyncadd [#allocation3], %s13
      %s15 = sshll.u32 [#allocation2], 4
      %s16 = int_to_ptr.vmem [resolvable:$true] %s15
      %21 = dma.hbm_to_vmem [thread:$0]  %s0, 128, %s16, [#allocation3], 64, 64, 4
    $region5: #{tpu_custom_call.1} parent=1 // pred_fallthru
      _
    // Predicated region
    $region6: #{tpu_custom_call.1} parent=1 // pred_check
      _
    $region7: #{tpu_custom_call.1} parent=1 // pred_check_branch
      %23 = sbr.rel (0) target = $region9
    $region8: #{tpu_custom_call.1} parent=1 // pred_region
      _
    $region9: #{tpu_custom_call.1} parent=1 // pred_fallthru
      _
    // Predicated region
    $region10: #{tpu_custom_call.1} parent=1 // pred_check
      _
    $region11: #{tpu_custom_call.1} parent=1 // pred_check_branch
      %25 = sbr.rel (0) target = $region13
    $region12: #{tpu_custom_call.1} parent=1 // pred_region
      _
    $region13: #{tpu_custom_call.1} parent=1 // pred_fallthru
      _
    // Predicated region
    $region14: #{tpu_custom_call.1} parent=1 // pred_check
      _
    $region15: #{tpu_custom_call.1} parent=1 // pred_check_branch
      %27 = sbr.rel (0) target = $region17
    $region16: #{tpu_custom_call.1} parent=1 // pred_region
      %28 = dma.done [#allocation3], 128
    $region17: #{tpu_custom_call.1} parent=1 // pred_fallthru
      _
    %v29 = vld [vmem:[#allocation2] sm:$0xf]
    %v30 = vld [vmem:[#allocation2 + $0x4] sm:$0xf]
    %v31 = vunpack.c.l.bf16 %v29
    %v32 = vunpack.c.l.bf16 %v30
    %vm33 = vcmask 261120
    %v34 = vsel %vm33, %v31, 0.0
    %35 = vadd.xlane.f32.xlu0 %v34
    %v36 = vpop.xlane.xlu0 %35
    %v37 = vsel %vm33, %v32, 0.0
    %38 = vadd.xlane.f32.xlu0 %v37
    %v39 = vpop.xlane.xlu0 %38
    %v40 = vrcp.pop 32.0
    %v41 = vmul.f32 %v36, %v40
    %v42 = vmul.f32 %v39, %v40
    %v43 = vsub.f32 %v31, %v41
    %v44 = vsub.f32 %v32, %v42
    %v45 = vmul.f32 %v43, %v43
    %v46 = vmul.f32 %v44, %v44
    %v47 = vsel %vm33, %v45, 0.0
    %48 = vadd.xlane.f32.xlu0 %v47
    %v49 = vpop.xlane.xlu0 %48
    %v50 = vsel %vm33, %v46, 0.0
    %51 = vadd.xlane.f32.xlu0 %v50
    %v52 = vpop.xlane.xlu0 %51
    %v53 = vmul.f32 %v49, %v40
    %v54 = vmul.f32 %v52, %v40
    %v55 = vadd.f32 %v53, 1e-05
    %v56 = vadd.f32 %v54, 1e-05
    %v57 = vrsqrt.pop %v55
    %v58 = vrsqrt.pop %v56
    %v59 = vmul.f32 %v43, %v57
    %v60 = vmul.f32 %v44, %v58
    %v61 = vld [vmem:[%s1] sm:$0x1]
    %v63 = vlaneseq
    %v64 = vshrl.u32 %v63, 7
    %v65 = vsub.s32 0, %v64
    %v66 = vrot.slane %v61, %v65
    %v68 = vmul.f32 %v59, %v66
    %v69 = vmul.f32 %v60, %v66
    %v70 = vld [vmem:[%s2] sm:$0x1]
    %v72 = vlaneseq
    %v73 = vshrl.u32 %v72, 7
    %v74 = vsub.s32 0, %v73
    %v75 = vrot.slane %v70, %v74
    %v77 = vadd.f32 %v68, %v75
    %v78 = vadd.f32 %v69, %v75
    %v79 = vpack.c.bf16 %v78, %v77
    %v81 = vunpack.c.l.b16 %v79
    %v82 = vunpack.c.h.b16 %v79
    %v83 = vpack.c.b16 %v81, %v81
    %v84 = vpack.c.b16 %v82, %v82
    %vm87 = vcmask 257024
    %88 = vst.msk [vmem:[#allocation5] sm:$0xf] %vm87, %v83
    %89 = vst.msk [vmem:[#allocation5 + $0x4] sm:$0xf] %vm87, %v84
    // Predicated region
    $region18: #{tpu_custom_call.1} parent=1 // pred_check
      _
    $region19: #{tpu_custom_call.1} parent=1 // pred_check_branch
      %91 = sbr.rel (0) target = $region21
    $region20: #{tpu_custom_call.1} parent=1 // pred_region
      %s93 = ssub.s32 128, 128
      %94 = vsyncadd [#allocation4], %s93
      %s95 = sshll.u32 [#allocation5], 4
      %s96 = int_to_ptr.vmem [resolvable:$true] %s95
      %101 = dma.vmem_to_hbm [thread:$0]  %s96, 128, %s3, [#allocation4], 64, 64, 4
    $region21: #{tpu_custom_call.1} parent=1 // pred_fallthru
      _
    // Predicated region
    $region22: #{tpu_custom_call.1} parent=1 // pred_check
      _
    $region23: #{tpu_custom_call.1} parent=1 // pred_check_branch
      %103 = sbr.rel (0) target = $region25
    $region24: #{tpu_custom_call.1} parent=1 // pred_region
      %104 = dma.done [#allocation4], 128
    $region25: #{tpu_custom_call.1} parent=1 // pred_fallthru
      _
    %105 = vsyncpa [#allocation3], 1
    %106 = vsyncpa [#allocation4], 1

</llo_original>
